<compile_context>
chip_gen: v7x
topology: tpu7x:2x2x1
jax: 0.10.0
libtpu: 0.0.40
codegen_flags: <defaults>
</compile_context>

<pallas_src>
import functools

import jax
import jax.numpy as jnp
from jax.experimental import pallas as pl
from jax.experimental.pallas import tpu as pltpu


# --------------------------------------------------------------------- utils
def _vmem_budget_bytes():
    """~75% of physical VMEM (headroom for Mosaic internal scratch)."""
    cap = 64 * 1024 * 1024                       # conservative default (v7x)
    try:
        cap = int(getattr(pltpu.get_tpu_info(), "vmem_capacity_bytes", cap))
    except Exception:
        pass
    return (cap * 3) // 4


def _largest_divisor_leq(n, cap):
    cap = max(1, min(n, cap))
    for d in range(cap, 0, -1):
        if n % d == 0:
            return d
    return 1


# ---------------------------------------------------------- fused (primary)
def _fused_kernel(x_ref, wr_ref, br_ref, we_ref, be_ref, o_ref):
    # x_ref: (bt, C, HW)  wr: (C, C_rd)  br: (1, C_rd)  we: (C_rd, C)  be: (1, C)
    x = x_ref[...]
    pooled = jnp.mean(x.astype(jnp.float32), axis=-1)                 # (bt, C)
    s = jnp.dot(pooled, wr_ref[...], preferred_element_type=jnp.float32)
    s = jnp.maximum(s + br_ref[...], 0.0)                             # relu
    z = jnp.dot(s, we_ref[...], preferred_element_type=jnp.float32)
    z = z + be_ref[...]
    e = 1.0 / (1.0 + jnp.exp(-z))                                     # sigmoid
    # keep the scale multiply in x's dtype (bf16 VALU on v6e/v7x)
    o_ref[...] = (x * e[:, :, None].astype(x.dtype)).astype(o_ref.dtype)


def _se_fused(x3, wr, br, we, be, budget):
    B, C, HW = x3.shape
    C_rd = wr.shape[1]
    slab = C * HW * x3.dtype.itemsize
    # in + out, double buffered, per batch tile; 4 MiB margin for weights etc.
    cap = max(1, (budget - (4 << 20)) // (4 * slab))
    if B >= 2:
        cap = min(cap, max(1, B // 2))           # >=2 grid steps for megacore
    b_tile = _largest_divisor_leq(B, cap)
    vmem_limit = min(budget, max(32 << 20, 4 * b_tile * slab + (4 << 20)))
    return pl.pallas_call(
        _fused_kernel,
        out_shape=jax.ShapeDtypeStruct((B, C, HW), x3.dtype),
        grid=(B // b_tile,),
        in_specs=[
            pl.BlockSpec((b_tile, C, HW), lambda i: (i, 0, 0)),
            pl.BlockSpec((C, C_rd), lambda i: (0, 0)),
            pl.BlockSpec((1, C_rd), lambda i: (0, 0)),
            pl.BlockSpec((C_rd, C), lambda i: (0, 0)),
            pl.BlockSpec((1, C), lambda i: (0, 0)),
        ],
        out_specs=pl.BlockSpec((b_tile, C, HW), lambda i: (i, 0, 0)),
        compiler_params=pltpu.CompilerParams(
            dimension_semantics=("parallel",),
            vmem_limit_bytes=vmem_limit),
    )(x3, wr, br, we, be)


# ------------------------------------------------------- two-pass (fallback)
def _excite_kernel(x_ref, wr_ref, br_ref, we_ref, be_ref, e_ref, *,
                   hw_total, hw_tile):
    # x_ref: (1, C, hw_tile); e_ref: (1, 1, C) resident accumulator/output
    h = pl.program_id(1)

    @pl.when(h == 0)
    def _():
        e_ref[...] = jnp.zeros_like(e_ref)

    xv = x_ref[...].astype(jnp.float32)
    if hw_total % hw_tile:                       # mask the ragged last HW tile
        lane = jax.lax.broadcasted_iota(jnp.int32, xv.shape, 2)
        xv = jnp.where(h * hw_tile + lane < hw_total, xv, 0.0)
    e_ref[...] += jnp.sum(xv, axis=-1)[:, None, :]                    # (1,1,C)

    @pl.when(h == pl.num_programs(1) - 1)
    def _():
        pooled = e_ref[...][0] * (1.0 / hw_total)                     # (1, C)
        s = jnp.dot(pooled, wr_ref[...], preferred_element_type=jnp.float32)
        s = jnp.maximum(s + br_ref[...], 0.0)
        z = jnp.dot(s, we_ref[...], preferred_element_type=jnp.float32)
        z = z + be_ref[...]
        e_ref[...] = (1.0 / (1.0 + jnp.exp(-z)))[None]                # (1,1,C)


def _scale_kernel(x_ref, e_ref, o_ref):
    # x_ref: (row_tile, HW)   e_ref: (row_tile, 1)   o_ref: (row_tile, HW)
    o_ref[...] = (x_ref[...] * e_ref[...]).astype(o_ref.dtype)


def _pick_hw_tile(HW, C, itemsize, cap_bytes):
    if HW <= 128:
        return HW                                # full extent (no 128 constraint)
    lanes_cap = max(1, cap_bytes // (C * itemsize * 128))
    return 128 * max(1, min(HW // 128, lanes_cap))


def _pick_row_tile(rows, HW, itemsize, cap_bytes):
    cap_rows = max(8, (cap_bytes // max(1, HW * itemsize)) // 8 * 8)
    row_tile = min(rows, min(1024, cap_rows))
    if rows >= 16:                               # >=2 grid steps (megacore)
        row_tile = min(row_tile, max(8, (rows // 2) // 8 * 8))
    if row_tile < rows:
        row_tile = max(8, (row_tile // 8) * 8)   # sublane-aligned partial tile
    return row_tile


def _se_two_pass(x3, wr, br, we, be, budget, *,
                 hw_cap_bytes=2 << 20, row_cap_bytes=4 << 20):
    B, C, HW = x3.shape
    itemsize = x3.dtype.itemsize
    C_rd = wr.shape[1]

    # -------- phase 1: e = sigmoid(expand(relu(reduce(mean_hw(x))))) --------
    hw_tile = _pick_hw_tile(HW, C, itemsize, hw_cap_bytes)
    n_hw = pl.cdiv(HW, hw_tile)
    excite = functools.partial(_excite_kernel, hw_total=HW, hw_tile=hw_tile)
    e = pl.pallas_call(
        excite,
        out_shape=jax.ShapeDtypeStruct((B, 1, C), jnp.float32),
        grid=(B, n_hw),
        in_specs=[
            pl.BlockSpec((1, C, hw_tile), lambda b, h: (b, 0, h)),
            pl.BlockSpec((C, C_rd), lambda b, h: (0, 0)),
            pl.BlockSpec((1, C_rd), lambda b, h: (0, 0)),
            pl.BlockSpec((C_rd, C), lambda b, h: (0, 0)),
            pl.BlockSpec((1, C), lambda b, h: (0, 0)),
        ],
        out_specs=pl.BlockSpec((1, 1, C), lambda b, h: (b, 0, 0)),
        compiler_params=pltpu.CompilerParams(
            dimension_semantics=("parallel", "arbitrary"),
            vmem_limit_bytes=min(budget, 32 << 20)),
    )(x3, wr, br, we, be)

    # -------- phase 2: streaming out = x * e (pure HBM-bound) --------------
    rows = B * C
    x2d = x3.reshape(rows, HW)                   # free for contiguous NCHW
    e2d = e.reshape(rows, 1).astype(x3.dtype)    # keep VPU path in x's dtype
    row_tile = _pick_row_tile(rows, HW, itemsize, row_cap_bytes)
    out2d = pl.pallas_call(
        _scale_kernel,
        out_shape=jax.ShapeDtypeStruct((rows, HW), x3.dtype),
        grid=(pl.cdiv(rows, row_tile),),
        in_specs=[
            pl.BlockSpec((row_tile, HW), lambda i: (i, 0)),
            pl.BlockSpec((row_tile, 1), lambda i: (i, 0)),
        ],
        out_specs=pl.BlockSpec((row_tile, HW), lambda i: (i, 0)),
        compiler_params=pltpu.CompilerParams(
            dimension_semantics=("parallel",),
            vmem_limit_bytes=min(budget, 32 << 20)),
    )(x2d, e2d)
    return out2d.reshape(B, C, HW)


# ------------------------------------------------------------------ wrapper
def se_block(x, w_reduce, b_reduce, w_expand, b_expand, *,
             force_two_pass=False, hw_cap_bytes=2 << 20, row_cap_bytes=4 << 20):
    """x: (B, C, H, W) NCHW. w_reduce: (C_rd, C, 1, 1), w_expand: (C, C_rd, 1, 1)."""
    B, C, H, W = x.shape
    HW = H * W
    C_rd = w_reduce.shape[0]

    x3 = x.reshape(B, C, HW)                                         # free reshape
    wr = jnp.transpose(w_reduce.reshape(C_rd, C)).astype(jnp.float32)  # (C, C_rd)
    we = jnp.transpose(w_expand.reshape(C, C_rd)).astype(jnp.float32)  # (C_rd, C)
    br = b_reduce.reshape(1, C_rd).astype(jnp.float32)
    be = b_expand.reshape(1, C).astype(jnp.float32)

    budget = _vmem_budget_bytes()
    slab = C * HW * x.dtype.itemsize
    if not force_two_pass and 4 * slab + (4 << 20) <= budget:
        out3 = _se_fused(x3, wr, br, we, be, budget)
    else:
        out3 = _se_two_pass(x3, wr, br, we, be, budget,
                            hw_cap_bytes=hw_cap_bytes,
                            row_cap_bytes=row_cap_bytes)
    return out3.reshape(B, C, H, W)


# ---------------------------------------------------------------- reference
def _reference(x, w_reduce, b_reduce, w_expand, b_expand):
    B, C, H, W = x.shape
    C_rd = w_reduce.shape[0]
    pooled = jnp.mean(x, axis=(2, 3))                                # (B, C)
    s = jax.nn.relu(pooled @ w_reduce.reshape(C_rd, C).T + b_reduce)
    e = jax.nn.sigmoid(s @ w_expand.reshape(C, C_rd).T + b_expand)   # (B, C)
    return x * e[:, :, None, None]


if __name__ == "__main__":
    def _make(B, C, H, W, rd_ratio=0.0625, seed=0):
        C_rd = max(1, int(C * rd_ratio))
        key = jax.random.PRNGKey(seed)
        kx, kwr, kbr, kwe, kbe = jax.random.split(key, 5)
        x = jax.random.normal(kx, (B, C, H, W), dtype=jnp.float32)
        w_r = jax.random.normal(kwr, (C_rd, C, 1, 1), dtype=jnp.float32) * 0.1
        b_r = jax.random.normal(kbr, (C_rd,), dtype=jnp.float32) * 0.1
        w_e = jax.random.normal(kwe, (C, C_rd, 1, 1), dtype=jnp.float32) * 0.1
        b_e = jax.random.normal(kbe, (C,), dtype=jnp.float32) * 0.1
        return x, w_r, b_r, w_e, b_e

    # --- primary (fused single-pass) path: in_channels=64, rd_ratio=0.0625 --
    args = _make(2, 64, 8, 8, seed=0)
    out = jax.block_until_ready(se_block(*args))
    ref = _reference(*args)
    assert out.shape == args[0].shape
    # MXU default-precision FC matmuls -> ~1e-4-level diffs vs the XLA
    # reference are expected; 1e-3 still catches any real bug.
    assert jnp.allclose(out, ref, atol=1e-3, rtol=1e-3), float(
        jnp.max(jnp.abs(out - ref)))

    # --- fallback (two-pass) path, forced with tiny caps so the HW
    #     accumulation and the ragged cdiv row tiling are both exercised -----
    args2 = _make(2, 64, 16, 16, seed=1)
    out2 = jax.block_until_ready(
        se_block(*args2, force_two_pass=True,
                 hw_cap_bytes=16 * 1024, row_cap_bytes=24 * 1024))
    ref2 = _reference(*args2)
    assert jnp.allclose(out2, ref2, atol=1e-3, rtol=1e-3), float(
        jnp.max(jnp.abs(out2 - ref2)))

    print("KERNEL_OK")
</pallas_src>

<mosaic_0001>
module attributes {stable_mosaic.version = 11 : i64} {
  func.func @_fused_kernel(%arg0: i32, %arg1: memref<1x64x64xf32, #tpu.memory_space<vmem>>, %arg2: memref<64x4xf32, #tpu.memory_space<vmem>>, %arg3: memref<1x4xf32, #tpu.memory_space<vmem>>, %arg4: memref<4x64xf32, #tpu.memory_space<vmem>>, %arg5: memref<1x64xf32, #tpu.memory_space<vmem>>, %arg6: memref<1x64x64xf32, #tpu.memory_space<vmem>>) attributes {dimension_semantics = [#tpu.dimension_semantics<parallel>], iteration_bounds = array<i64: 2>, scalar_prefetch = 0 : i64, scratch_operands = 0 : i64, tpu.core_type = #tpu.core_type<tc>, window_params = [{transform_indices = @transform_0, window_bounds = array<i64: 1, 64, 64>}, {pipeline_mode = #tpu.pipeline_mode<synchronous>, transform_indices = @transform_1, window_bounds = array<i64: 64, 4>}, {pipeline_mode = #tpu.pipeline_mode<synchronous>, transform_indices = @transform_2, window_bounds = array<i64: 1, 4>}, {pipeline_mode = #tpu.pipeline_mode<synchronous>, transform_indices = @transform_3, window_bounds = array<i64: 4, 64>}, {pipeline_mode = #tpu.pipeline_mode<synchronous>, transform_indices = @transform_4, window_bounds = array<i64: 1, 64>}, {transform_indices = @transform_5, window_bounds = array<i64: 1, 64, 64>}]} {
    %c0 = arith.constant 0 : index
    %c0_0 = arith.constant 0 : index
    %c0_1 = arith.constant 0 : index
    %0 = vector.load %arg1[%c0, %c0_0, %c0_1] : memref<1x64x64xf32, #tpu.memory_space<vmem>>, vector<1x64x64xf32>
    %cst = arith.constant dense<0.000000e+00> : vector<1x64xf32>
    %1 = vector.multi_reduction <add>, %0, %cst [2] : vector<1x64x64xf32> to vector<1x64xf32>
    %cst_2 = arith.constant 6.400000e+01 : f32
    %2 = vector.broadcast %cst_2 : f32 to vector<1x64xf32>
    %3 = arith.divf %1, %2 : vector<1x64xf32>
    %c0_3 = arith.constant 0 : index
    %c0_4 = arith.constant 0 : index
    %4 = vector.load %arg2[%c0_3, %c0_4] : memref<64x4xf32, #tpu.memory_space<vmem>>, vector<64x4xf32>
    %cst_5 = arith.constant dense<0.000000e+00> : vector<1x4xf32>
    %5 = tpu.matmul %3, %4, %cst_5 {dimension_numbers = #tpu.dot_dimension_numbers<[1], [0], [0], [1], [0, 0, 1, 1], [], []>} : vector<1x64xf32>, vector<64x4xf32>, vector<1x4xf32> -> vector<1x4xf32>
    %c0_6 = arith.constant 0 : index
    %c0_7 = arith.constant 0 : index
    %6 = vector.load %arg3[%c0_6, %c0_7] : memref<1x4xf32, #tpu.memory_space<vmem>>, vector<1x4xf32>
    %7 = arith.addf %5, %6 : vector<1x4xf32>
    %cst_8 = arith.constant 0.000000e+00 : f32
    %8 = vector.broadcast %cst_8 : f32 to vector<1x4xf32>
    %9 = arith.maximumf %7, %8 : vector<1x4xf32>
    %c0_9 = arith.constant 0 : index
    %c0_10 = arith.constant 0 : index
    %10 = vector.load %arg4[%c0_9, %c0_10] : memref<4x64xf32, #tpu.memory_space<vmem>>, vector<4x64xf32>
    %cst_11 = arith.constant dense<0.000000e+00> : vector<1x64xf32>
    %11 = tpu.matmul %9, %10, %cst_11 {dimension_numbers = #tpu.dot_dimension_numbers<[1], [0], [0], [1], [0, 0, 1, 1], [], []>} : vector<1x4xf32>, vector<4x64xf32>, vector<1x64xf32> -> vector<1x64xf32>
    %c0_12 = arith.constant 0 : index
    %c0_13 = arith.constant 0 : index
    %12 = vector.load %arg5[%c0_12, %c0_13] : memref<1x64xf32, #tpu.memory_space<vmem>>, vector<1x64xf32>
    %13 = arith.addf %11, %12 : vector<1x64xf32>
    %cst_14 = arith.constant 0.000000e+00 : f32
    %14 = vector.broadcast %cst_14 : f32 to vector<1x64xf32>
    %15 = arith.subf %14, %13 : vector<1x64xf32>
    %16 = math.exp %15 : vector<1x64xf32>
    %cst_15 = arith.constant 1.000000e+00 : f32
    %17 = vector.broadcast %cst_15 : f32 to vector<1x64xf32>
    %18 = arith.addf %17, %16 : vector<1x64xf32>
    %cst_16 = arith.constant 1.000000e+00 : f32
    %19 = vector.broadcast %cst_16 : f32 to vector<1x64xf32>
    %20 = arith.divf %19, %18 : vector<1x64xf32>
    %21 = vector.shape_cast %20 : vector<1x64xf32> to vector<1x64x1xf32>
    %22 = vector.broadcast %21 : vector<1x64x1xf32> to vector<1x64x64xf32>
    %23 = arith.mulf %0, %22 : vector<1x64x64xf32>
    %c0_17 = arith.constant 0 : index
    %c0_18 = arith.constant 0 : index
    %c0_19 = arith.constant 0 : index
    %24 = vector.load %arg6[%c0_17, %c0_18, %c0_19] : memref<1x64x64xf32, #tpu.memory_space<vmem>>, vector<1x64x64xf32>
    tpu.vector_store %arg6[%c0_17, %c0_18, %c0_19], %23 {strides = array<i32>} : memref<1x64x64xf32, #tpu.memory_space<vmem>>, vector<1x64x64xf32>,
    return
  }
  func.func @transform_0(%arg0: i32) -> (i32, i32, i32) {
    %c0_i32 = arith.constant 0 : i32
    %c0_i32_0 = arith.constant 0 : i32
    %c0_i32_1 = arith.constant 0 : i32
    return %arg0, %c0_i32, %c0_i32_0 : i32, i32, i32
  }
  func.func @transform_1(%arg0: i32) -> (i32, i32) {
    %c0_i32 = arith.constant 0 : i32
    %c0_i32_0 = arith.constant 0 : i32
    %c0_i32_1 = arith.constant 0 : i32
    return %c0_i32, %c0_i32_0 : i32, i32
  }
  func.func @transform_2(%arg0: i32) -> (i32, i32) {
    %c0_i32 = arith.constant 0 : i32
    %c0_i32_0 = arith.constant 0 : i32
    %c0_i32_1 = arith.constant 0 : i32
    return %c0_i32, %c0_i32_0 : i32, i32
  }
  func.func @transform_3(%arg0: i32) -> (i32, i32) {
    %c0_i32 = arith.constant 0 : i32
    %c0_i32_0 = arith.constant 0 : i32
    %c0_i32_1 = arith.constant 0 : i32
    return %c0_i32, %c0_i32_0 : i32, i32
  }
  func.func @transform_4(%arg0: i32) -> (i32, i32) {
    %c0_i32 = arith.constant 0 : i32
    %c0_i32_0 = arith.constant 0 : i32
    %c0_i32_1 = arith.constant 0 : i32
    return %c0_i32, %c0_i32_0 : i32, i32
  }
  func.func @transform_5(%arg0: i32) -> (i32, i32, i32) {
    %c0_i32 = arith.constant 0 : i32
    %c0_i32_0 = arith.constant 0 : i32
    %c0_i32_1 = arith.constant 0 : i32
    return %arg0, %c0_i32, %c0_i32_0 : i32, i32, i32
  }
}

</mosaic_0001>

<llo_original>
// kernel: tpu_custom_call.1
$region0: #{tpu_custom_call.1}
  #allocation0 [shape = 'u32[]', space=smem, size = 0x4, offset = 0x4, fixed_abs, tag = 'smem constant byte address 0x4 - core index']
  #allocation1 [shape = 'u32[144,128]{1,0:T(1,128)}', space=vmem, size = 0x12000, scoped, tag = 'internal scratch']
  %s0 = inlined_call_operand.hbm [shape: f32[2,64,64], index: 0, kind: input, shape index: {}]
  %s1 = inlined_call_operand.vmem [shape: f32[64,4], index: 1, kind: input, shape index: {}]
  %s2 = inlined_call_operand.vmem [shape: f32[1,4], index: 2, kind: input, shape index: {}]
  %s3 = inlined_call_operand.vmem [shape: f32[4,64], index: 3, kind: input, shape index: {}]
  %s4 = inlined_call_operand.vmem [shape: f32[1,64], index: 4, kind: input, shape index: {}]
  %s5 = inlined_call_operand.hbm [shape: f32[2,64,64], index: 5, kind: output, shape index: {}]
  %s6 = sld [smem:[#allocation0]]
  $region57: #{tpu_custom_call.1} parent=0
    _
  %s8 = ssub.s32 1, %s6
  %s9 = scalar_select 0, %s8, %s6
  $region1: #{tpu_custom_call.1} parent=0
    #allocation2 [shape = 'u8[65536]{0}', space=vmem, size = 0x10000, scoped, tag = 'input window, operand 0']
    #allocation3 [shape = 's32[2]{0}', space=sflag, size = 0x8, scoped, tag = 'scoped memory for tpu_custom_call.1']
    #allocation4 [shape = 's32[2]{0}', space=sflag, size = 0x8, scoped, tag = 'scoped memory for tpu_custom_call.1']
    #allocation5 [shape = 'u8[65536]{0}', space=vmem, size = 0x10000, scoped, tag = 'output window, operand 0']
    %10 = vsyncpa [#allocation3], 0
    %s11 = scalar_lea.sflag [#allocation3], 1
    %12 = vsyncpa %s11, 0
    %13 = vsyncpa [#allocation4], 0
    %s14 = scalar_lea.sflag [#allocation4], 1
    %15 = vsyncpa %s14, 0
    loop: start=0, step=1, limit=4
    $region2: #{tpu_custom_call.1} parent=1 // loop_pre_header
      _
    $region3: #{tpu_custom_call.1} parent=1 // loop_header
      %s17 = sphi 0, %s21
      %p18 = scmp.ge.s32.totalorder %s17, 4
      %s27 = sphi 0, %s29
      %s30 = sphi 0, %s27
      %s31 = sphi 0, %s30
      %s47 = sphi 0, %s31
      %s51 = sphi 0, %s51
      %s53 = sphi 0, %s51
      %s54 = sphi 0, %s53
      %s68 = sphi 0, %s54
      %s72 = sphi 0, %s72
      %s74 = sphi 0, %s72
      %s75 = sphi 0, %s74
      %s89 = sphi 0, %s75
      %s93 = sphi 0, %s93
      %s95 = sphi 0, %s93
      %s96 = sphi 0, %s95
      %s110 = sphi 0, %s96
      %s114 = sphi 0, %s114
      %s116 = sphi 0, %s114
      %s117 = sphi 0, %s116
      %s131 = sphi 0, %s117
      %s137 = sphi 0, %s139
      %s140 = sphi 0, %s137
      %s141 = sphi 0, %s140
      %s157 = sphi 0, %s141
    $region4: #{tpu_custom_call.1} parent=1 // loop_header_branch
      %20 = sbr.rel (%p18) target = $region8
    $region5: #{tpu_custom_call.1} parent=1 // loop_body
      %s22 = ssub.s32 %s17, 1
      %s23 = ssub.s32 %s17, 2
      %s24 = sadd.s32 %s17, 1
      %s25 = ssub.s32 %s17, %s24
      %p26 = scmp.eq.s32.totalorder %s25, 0
      %s28 = sadd.s32 %s27, 1
      %s29 = scalar_select %p26, %s27, %s28
      %p32 = pneg %p26
      %p33 = scmp.eq.s32.totalorder %s17, 1
      %p34 = por %p32, %p33
      %p35 = scmp.ne.s32.totalorder %s27, %s30
      %p36 = scmp.eq.s32.totalorder %s17, 0
      %p37 = por %p35, %p36
      %p38 = scmp.ne.s32.totalorder %s27, %s30
      %p39 = scmp.eq.s32.totalorder %s22, 1
      %p40 = por %p38, %p39
      %p41 = scmp.ne.s32.totalorder %s30, %s31
      %p42 = scmp.eq.s32.totalorder %s22, 0
      %p43 = por %p41, %p42
      %p44 = scmp.ne.s32.totalorder %s30, %s31
      %p45 = scmp.eq.s32.totalorder %s23, 1
      %p46 = por %p44, %p45
      %p48 = scmp.ne.s32.totalorder %s31, %s47
      %p49 = scmp.eq.s32.totalorder %s23, 0
      %p50 = por %p48, %p49
      %s52 = sadd.s32 %s51, 1
      %p55 = scmp.eq.s32.totalorder %s17, 1
      %p56 = scmp.ne.s32.totalorder %s51, %s53
      %p57 = scmp.eq.s32.totalorder %s17, 0
      %p58 = por %p56, %p57
      %p59 = scmp.ne.s32.totalorder %s51, %s53
      %p60 = scmp.eq.s32.totalorder %s22, 1
      %p61 = por %p59, %p60
      %p62 = scmp.ne.s32.totalorder %s53, %s54
      %p63 = scmp.eq.s32.totalorder %s22, 0
      %p64 = por %p62, %p63
      %p65 = scmp.ne.s32.totalorder %s53, %s54
      %p66 = scmp.eq.s32.totalorder %s23, 1
      %p67 = por %p65, %p66
      %p69 = scmp.ne.s32.totalorder %s54, %s68
      %p70 = scmp.eq.s32.totalorder %s23, 0
      %p71 = por %p69, %p70
      %s73 = sadd.s32 %s72, 1
      %p76 = scmp.eq.s32.totalorder %s17, 1
      %p77 = scmp.ne.s32.totalorder %s72, %s74
      %p78 = scmp.eq.s32.totalorder %s17, 0
      %p79 = por %p77, %p78
      %p80 = scmp.ne.s32.totalorder %s72, %s74
      %p81 = scmp.eq.s32.totalorder %s22, 1
      %p82 = por %p80, %p81
      %p83 = scmp.ne.s32.totalorder %s74, %s75
      %p84 = scmp.eq.s32.totalorder %s22, 0
      %p85 = por %p83, %p84
      %p86 = scmp.ne.s32.totalorder %s74, %s75
      %p87 = scmp.eq.s32.totalorder %s23, 1
      %p88 = por %p86, %p87
      %p90 = scmp.ne.s32.totalorder %s75, %s89
      %p91 = scmp.eq.s32.totalorder %s23, 0
      %p92 = por %p90, %p91
      %s94 = sadd.s32 %s93, 1
      %p97 = scmp.eq.s32.totalorder %s17, 1
      %p98 = scmp.ne.s32.totalorder %s93, %s95
      %p99 = scmp.eq.s32.totalorder %s17, 0
      %p100 = por %p98, %p99
      %p101 = scmp.ne.s32.totalorder %s93, %s95
      %p102 = scmp.eq.s32.totalorder %s22, 1
      %p103 = por %p101, %p102
      %p104 = scmp.ne.s32.totalorder %s95, %s96
      %p105 = scmp.eq.s32.totalorder %s22, 0
      %p106 = por %p104, %p105
      %p107 = scmp.ne.s32.totalorder %s95, %s96
      %p108 = scmp.eq.s32.totalorder %s23, 1
      %p109 = por %p107, %p108
      %p111 = scmp.ne.s32.totalorder %s96, %s110
      %p112 = scmp.eq.s32.totalorder %s23, 0
      %p113 = por %p111, %p112
      %s115 = sadd.s32 %s114, 1
      %p118 = scmp.eq.s32.totalorder %s17, 1
      %p119 = scmp.ne.s32.totalorder %s114, %s116
      %p120 = scmp.eq.s32.totalorder %s17, 0
      %p121 = por %p119, %p120
      %p122 = scmp.ne.s32.totalorder %s114, %s116
      %p123 = scmp.eq.s32.totalorder %s22, 1
      %p124 = por %p122, %p123
      %p125 = scmp.ne.s32.totalorder %s116, %s117
      %p126 = scmp.eq.s32.totalorder %s22, 0
      %p127 = por %p125, %p126
      %p128 = scmp.ne.s32.totalorder %s116, %s117
      %p129 = scmp.eq.s32.totalorder %s23, 1
      %p130 = por %p128, %p129
      %p132 = scmp.ne.s32.totalorder %s117, %s131
      %p133 = scmp.eq.s32.totalorder %s23, 0
      %p134 = por %p132, %p133
      %s135 = ssub.s32 %s17, %s24
      %p136 = scmp.eq.s32.totalorder %s135, 0
      %s138 = sadd.s32 %s137, 1
      %s139 = scalar_select %p136, %s137, %s138
      %p142 = pneg %p136
      %p143 = scmp.eq.s32.totalorder %s17, 1
      %p144 = por %p142, %p143
      %p145 = scmp.ne.s32.totalorder %s137, %s140
      %p146 = scmp.eq.s32.totalorder %s17, 0
      %p147 = por %p145, %p146
      %p148 = scmp.ne.s32.totalorder %s137, %s140
      %p149 = scmp.eq.s32.totalorder %s22, 1
      %p150 = por %p148, %p149
      %p151 = scmp.ne.s32.totalorder %s140, %s141
      %p152 = scmp.eq.s32.totalorder %s22, 0
      %p153 = por %p151, %p152
      %p154 = scmp.ne.s32.totalorder %s140, %s141
      %p155 = scmp.eq.s32.totalorder %s23, 1
      %p156 = por %p154, %p155
      %p158 = scmp.ne.s32.totalorder %s141, %s157
      %p159 = scmp.eq.s32.totalorder %s23, 0
      %p160 = por %p158, %p159
      %p161 = scmp.le.s32.totalorder 1, %s17
      %p162 = scmp.lt.s32.totalorder %s17, 3
      %p163 = pnand %p161, %p162
      %p164 = pneg %p163
      // Predicated region
      $region9: #{tpu_custom_call.1} parent=5 // pred_check
        _
      $region10: #{tpu_custom_call.1} parent=5 // pred_check_branch
        %166 = sbr.rel (%p163) target = $region12
      $region11: #{tpu_custom_call.1} parent=5 // pred_region
        %s167 = ssub.s32 %s17, 1
        // Predicated region
        $region13: #{tpu_custom_call.1} parent=11 // pred_check
          %p168 = pneg %p64
        $region14: #{tpu_custom_call.1} parent=11 // pred_check_branch
          %170 = sbr.rel (%p168) target = $region16
        $region15: #{tpu_custom_call.1} parent=11 // pred_region
          _
        $region16: #{tpu_custom_call.1} parent=11 // pred_fallthru
          _
        // Predicated region
        $region17: #{tpu_custom_call.1} parent=11 // pred_check
          %p171 = pneg %p85
        $region18: #{tpu_custom_call.1} parent=11 // pred_check_branch
          %173 = sbr.rel (%p171) target = $region20
        $region19: #{tpu_custom_call.1} parent=11 // pred_region
          _
        $region20: #{tpu_custom_call.1} parent=11 // pred_fallthru
          _
        // Predicated region
        $region21: #{tpu_custom_call.1} parent=11 // pred_check
          %p174 = pneg %p106
        $region22: #{tpu_custom_call.1} parent=11 // pred_check_branch
          %176 = sbr.rel (%p174) target = $region24
        $region23: #{tpu_custom_call.1} parent=11 // pred_region
          _
        $region24: #{tpu_custom_call.1} parent=11 // pred_fallthru
          _
        // Predicated region
        $region25: #{tpu_custom_call.1} parent=11 // pred_check
          %p177 = pneg %p127
        $region26: #{tpu_custom_call.1} parent=11 // pred_check_branch
          %179 = sbr.rel (%p177) target = $region28
        $region27: #{tpu_custom_call.1} parent=11 // pred_region
          _
        $region28: #{tpu_custom_call.1} parent=11 // pred_fallthru
          _
      $region12: #{tpu_custom_call.1} parent=5 // pred_fallthru
        _
      %p180 = scmp.lt.s32.totalorder %s17, 2
      // Predicated region
      $region29: #{tpu_custom_call.1} parent=5 // pred_check
        %p181 = pneg %p180
      $region30: #{tpu_custom_call.1} parent=5 // pred_check_branch
        %183 = sbr.rel (%p181) target = $region32
      $region31: #{tpu_custom_call.1} parent=5 // pred_region
        // Predicated region
        $region33: #{tpu_custom_call.1} parent=31 // pred_check
          %p184 = pneg %p37
        $region34: #{tpu_custom_call.1} parent=31 // pred_check_branch
          %186 = sbr.rel (%p184) target = $region36
        $region35: #{tpu_custom_call.1} parent=31 // pred_region
          %s187 = sand.u32 %s27, 1
          %s188 = scalar_lea.sflag [#allocation3], %s187
          %s189 = sand.u32 %s27, 1
          %s190 = smul.addr %s189, 64
          %s191 = scalar_lea.vmem [#allocation2], %s190
          %s193 = ssub.s32 1024, 1024
          %194 = vsyncadd %s188, %s193
          %s195 = smul.addr %s17, 8
          %s196 = smul.addr %s195, 128
          %s197 = scalar_lea.hbm %s0, %s196
          %s198 = sshll.u32 %s191, 4
          %s199 = int_to_ptr.vmem [resolvable:$true] %s198
          %204 = dma.hbm_to_vmem [thread:$0]  %s197, 1024, %s199, %s188, 128, 128, 8
        $region36: #{tpu_custom_call.1} parent=31 // pred_fallthru
          _
      $region32: #{tpu_custom_call.1} parent=5 // pred_fallthru
        _
      %p205 = scmp.le.s32.totalorder 1, %s17
      %p206 = scmp.lt.s32.totalorder %s17, 3
      %p207 = pnand %p205, %p206
      %p208 = pneg %p207
      // Predicated region
      $region37: #{tpu_custom_call.1} parent=5 // pred_check
        _
      $region38: #{tpu_custom_call.1} parent=5 // pred_check_branch
        %210 = sbr.rel (%p207) target = $region40
      $region39: #{tpu_custom_call.1} parent=5 // pred_region
        %s211 = ssub.s32 %s17, 1
        %s212 = sand.u32 %s30, 1
        %s213 = scalar_lea.sflag [#allocation3], %s212
        %s214 = sand.u32 %s30, 1
        %s215 = smul.addr %s214, 64
        %s216 = scalar_lea.vmem [#allocation2], %s215
        // Predicated region
        $region41: #{tpu_custom_call.1} parent=39 // pred_check
          %p217 = pneg %p43
        $region42: #{tpu_custom_call.1} parent=39 // pred_check_branch
          %219 = sbr.rel (%p217) target = $region44
        $region43: #{tpu_custom_call.1} parent=39 // pred_region
          %220 = dma.done %s213, 1024
        $region44: #{tpu_custom_call.1} parent=39 // pred_fallthru
          _
        %s221 = sand.u32 %s30, 1
        %s222 = scalar_lea.sflag [#allocation3], %s221
        %s223 = sand.u32 %s30, 1
        %s224 = smul.addr %s223, 64
        %s225 = scalar_lea.vmem [#allocation2], %s224
        %p226 = pneg %p43
        %p227 = pneg %p40
        %p228 = pneg %p64
        %p229 = pneg %p61
        %p230 = pneg %p85
        %p231 = pneg %p82
        %p232 = pneg %p106
        %p233 = pneg %p103
        %p234 = pneg %p127
        %p235 = pneg %p124
        %p236 = pneg %p153
        %p237 = pneg %p150
        %s238 = sand.u32 %s140, 1
        %s239 = scalar_lea.sflag [#allocation4], %s238
        %s240 = sand.u32 %s140, 1
        %s241 = smul.addr %s240, 64
        %s242 = scalar_lea.vmem [#allocation5], %s241
        %v243 = vld [vmem:[%s216] sm:$0xff]
        %v244 = vld [vmem:[%s216 + $0x8] sm:$0xff]
        %v245 = vld [vmem:[%s216 + $0x10] sm:$0xff]
        %v246 = vld [vmem:[%s216 + $0x18] sm:$0xff]
        %v247 = vld [vmem:[%s216 + $0x20] sm:$0xff]
        %v248 = vld [vmem:[%s216 + $0x28] sm:$0xff]
        %v249 = vld [vmem:[%s216 + $0x30] sm:$0xff]
        %v250 = vld [vmem:[%s216 + $0x38] sm:$0xff]
        %vm251 = vcmask 523264
        %v252 = vsel %vm251, %v243, 0.0
        %253 = vadd.xlane.f32.xlu0 %v252
        %v254 = vpop.xlane.xlu0 %253
        %v255 = vsel %vm251, %v244, 0.0
        %256 = vadd.xlane.f32.xlu0 %v255
        %v257 = vpop.xlane.xlu0 %256
        %v258 = vsel %vm251, %v245, 0.0
        %259 = vadd.xlane.f32.xlu0 %v258
        %v260 = vpop.xlane.xlu0 %259
        %v261 = vsel %vm251, %v246, 0.0
        %262 = vadd.xlane.f32.xlu0 %v261
        %v263 = vpop.xlane.xlu0 %262
        %v264 = vsel %vm251, %v247, 0.0
        %265 = vadd.xlane.f32.xlu0 %v264
        %v266 = vpop.xlane.xlu0 %265
        %v267 = vsel %vm251, %v248, 0.0
        %268 = vadd.xlane.f32.xlu0 %v267
        %v269 = vpop.xlane.xlu0 %268
        %v270 = vsel %vm251, %v249, 0.0
        %271 = vadd.xlane.f32.xlu0 %v270
        %v272 = vpop.xlane.xlu0 %271
        %v273 = vsel %vm251, %v250, 0.0
        %274 = vadd.xlane.f32.xlu0 %v273
        %v275 = vpop.xlane.xlu0 %274
        %v276 = vrcp.pop 64.0
        %v277 = vmul.f32 %v254, %v276
        %v278 = vmul.f32 %v257, %v276
        %v279 = vmul.f32 %v260, %v276
        %v280 = vmul.f32 %v263, %v276
        %v281 = vmul.f32 %v266, %v276
        %v282 = vmul.f32 %v269, %v276
        %v283 = vmul.f32 %v272, %v276
        %v284 = vmul.f32 %v275, %v276
        %v285 = vld [vmem:[%s1] sm:$0xff]
        %v286 = vld [vmem:[%s1 + $0x8] sm:$0xff]
        %v287 = vld [vmem:[%s1 + $0x10] sm:$0xff]
        %v288 = vld [vmem:[%s1 + $0x18] sm:$0xff]
        %v289 = vld [vmem:[%s1 + $0x20] sm:$0xff]
        %v290 = vld [vmem:[%s1 + $0x28] sm:$0xff]
        %v291 = vld [vmem:[%s1 + $0x30] sm:$0xff]
        %v292 = vld [vmem:[%s1 + $0x38] sm:$0xff]
        %v293 = vld [vmem:[%s2] sm:$0x1]
        %v302 = vlaneseq
        %v303 = vand.u32 %v302, 127
        %v304 = vlaneseq
        %v305 = vshrl.u32 %v304, 7
        %v306 = vsub.s32 %v303, %v305
        %v307 = vrot.slane %v277, %v306
        %v308 = vadd.s32 %v303, 4294967288
        %v309 = vlaneseq
        %v310 = vshrl.u32 %v309, 7
        %v311 = vsub.s32 %v308, %v310
        %v312 = vrot.slane %v278, %v311
        %vm313 = vcmask 130112
        %v314 = vsel %vm313, %v312, %v307
        %v315 = vadd.s32 %v303, 4294967280
        %v316 = vlaneseq
        %v317 = vshrl.u32 %v316, 7
        %v318 = vsub.s32 %v315, %v317
        %v319 = vrot.slane %v279, %v318
        %vm320 = vcmask 195712
        %v321 = vsel %vm320, %v319, %v314
        %v322 = vadd.s32 %v303, 4294967272
        %v323 = vlaneseq
        %v324 = vshrl.u32 %v323, 7
        %v325 = vsub.s32 %v322, %v324
        %v326 = vrot.slane %v280, %v325
        %vm327 = vcmask 261312
        %v328 = vsel %vm327, %v326, %v321
        %v329 = vadd.s32 %v303, 4294967264
        %v330 = vlaneseq
        %v331 = vshrl.u32 %v330, 7
        %v332 = vsub.s32 %v329, %v331
        %v333 = vrot.slane %v281, %v332
        %vm334 = vcmask 326912
        %v335 = vsel %vm334, %v333, %v328
        %v336 = vadd.s32 %v303, 4294967256
        %v337 = vlaneseq
        %v338 = vshrl.u32 %v337, 7
        %v339 = vsub.s32 %v336, %v338
        %v340 = vrot.slane %v282, %v339
        %vm341 = vcmask 392512
        %v342 = vsel %vm341, %v340, %v335
        %v343 = vadd.s32 %v303, 4294967248
        %v344 = vlaneseq
        %v345 = vshrl.u32 %v344, 7
        %v346 = vsub.s32 %v343, %v345
        %v347 = vrot.slane %v283, %v346
        %vm348 = vcmask 458112
        %v349 = vsel %vm348, %v347, %v342
        %v350 = vadd.s32 %v303, 4294967240
        %v351 = vlaneseq
        %v352 = vshrl.u32 %v351, 7
        %v353 = vsub.s32 %v350, %v352
        %v354 = vrot.slane %v284, %v353
        %vm355 = vcmask 523712
        %v356 = vsel %vm355, %v354, %v349
        %v357 = vsel %vm251, %v356, 0
        %359 = vmatprep.subr.mxu0 0.0
        %360 = vmatpush1.msra.mxu0 %v285
        %361 = vmatprep.subr.mxu0 0.0
        %362 = vmatpush1.msra.mxu0 %v286
        %363 = vmatprep.subr.mxu0 0.0
        %364 = vmatpush1.msra.mxu0 %v287
        %365 = vmatprep.subr.mxu0 0.0
        %366 = vmatpush1.msra.mxu0 %v288
        %367 = vmatprep.subr.mxu0 0.0
        %368 = vmatpush1.msra.mxu0 %v289
        %369 = vmatprep.subr.mxu0 0.0
        %370 = vmatpush1.msra.mxu0 %v290
        %371 = vmatprep.subr.mxu0 0.0
        %372 = vmatpush1.msra.mxu0 %v291
        %373 = vmatprep.subr.mxu0 0.0
        %374 = vmatpush1.msra.mxu0 %v292
        %375 = vmatprep.subr.mxu0 0.0
        %376 = vmatpush1.msra.mxu0 0.0
        %377 = vmatprep.subr.mxu0 0.0
        %378 = vmatpush1.msra.mxu0 0.0
        %379 = vmatprep.subr.mxu0 0.0
        %380 = vmatpush1.msra.mxu0 0.0
        %381 = vmatprep.subr.mxu0 0.0
        %382 = vmatpush1.msra.mxu0 0.0
        %383 = vmatprep.subr.mxu0 0.0
        %384 = vmatpush1.msra.mxu0 0.0
        %385 = vmatprep.subr.mxu0 0.0
        %386 = vmatpush1.msra.mxu0 0.0
        %387 = vmatprep.subr.mxu0 0.0
        %388 = vmatpush1.msra.mxu0 0.0
        %389 = vmatprep.subr.mxu0 0.0
        %390 = vmatpush1.msra.mxu0 0.0
        %391 = vmatprep.subr.mxu0 0.0
        %392 = vmatpush1.msra.mxu0 0.0
        %393 = vmatprep.subr.mxu0 0.0
        %394 = vmatpush1.msra.mxu0 0.0
        %395 = vmatprep.subr.mxu0 0.0
        %396 = vmatpush1.msra.mxu0 0.0
        %397 = vmatprep.subr.mxu0 0.0
        %398 = vmatpush1.msra.mxu0 0.0
        %399 = vmatprep.subr.mxu0 0.0
        %400 = vmatpush1.msra.mxu0 0.0
        %401 = vmatprep.subr.mxu0 0.0
        %402 = vmatpush1.msra.mxu0 0.0
        %403 = vmatprep.subr.mxu0 0.0
        %404 = vmatpush1.msra.mxu0 0.0
        %405 = vmatprep.subr.mxu0 0.0
        %406 = vmatpush1.msra.mxu0 0.0
        %407 = vmatprep.subr.mxu0 0.0
        %408 = vmatpush1.msra.mxu0 0.0
        %409 = vmatprep.subr.mxu0 0.0
        %410 = vmatpush1.msra.mxu0 0.0
        %411 = vmatprep.subr.mxu0 0.0
        %412 = vmatpush1.msra.mxu0 0.0
        %413 = vmatprep.subr.mxu0 0.0
        %414 = vmatpush1.msra.mxu0 0.0
        %415 = vmatprep.subr.mxu0 0.0
        %416 = vmatpush1.msra.mxu0 0.0
        %417 = vmatprep.subr.mxu0 0.0
        %418 = vmatpush1.msra.mxu0 0.0
        %419 = vmatprep.subr.mxu0 0.0
        %420 = vmatpush1.msra.mxu0 0.0
        %421 = vmatprep.subr.mxu0 0.0
        %422 = vmatpush1.msra.mxu0 0.0
        %423 = vmatprep.mubr.f32.mxu0 0.0
        %424 = vmatmul.mubr.f32.gmra.mrb[0].mxu0 %v357
        %v425 = vpop.f32.mrb[0].mxu0
        %v426 = vadd.f32 %v293, %v425
        %v427 = vpop.f32.mrb[0].mxu0
        %428 = vdwg.mxu0
        %v429 = vmax.f32 %v426, 0.0
        %v430 = vld [vmem:[%s3] sm:$0xf]
        %v431 = vld [vmem:[%s4] sm:$0x1]
        %vm432 = vcmask 31744
        %v434 = vsel %vm432, %v429, 0
        %vm436 = vcmask 1043456
        %v438 = vsel %vm436, %v430, 0
        %440 = vmatprep.subr.mxu0 0.0
        %441 = vmatpush1.msra.mxu0 %v438
        %442 = vmatprep.subr.mxu0 0.0
        %443 = vmatpush1.msra.mxu0 0.0
        %444 = vmatprep.subr.mxu0 0.0
        %445 = vmatpush1.msra.mxu0 0.0
        %446 = vmatprep.subr.mxu0 0.0
        %447 = vmatpush1.msra.mxu0 0.0
        %448 = vmatprep.subr.mxu0 0.0
        %449 = vmatpush1.msra.mxu0 0.0
        %450 = vmatprep.subr.mxu0 0.0
        %451 = vmatpush1.msra.mxu0 0.0
        %452 = vmatprep.subr.mxu0 0.0
        %453 = vmatpush1.msra.mxu0 0.0
        %454 = vmatprep.subr.mxu0 0.0
        %455 = vmatpush1.msra.mxu0 0.0
        %456 = vmatprep.subr.mxu0 0.0
        %457 = vmatpush1.msra.mxu0 0.0
        %458 = vmatprep.subr.mxu0 0.0
        %459 = vmatpush1.msra.mxu0 0.0
        %460 = vmatprep.subr.mxu0 0.0
        %461 = vmatpush1.msra.mxu0 0.0
        %462 = vmatprep.subr.mxu0 0.0
        %463 = vmatpush1.msra.mxu0 0.0
        %464 = vmatprep.subr.mxu0 0.0
        %465 = vmatpush1.msra.mxu0 0.0
        %466 = vmatprep.subr.mxu0 0.0
        %467 = vmatpush1.msra.mxu0 0.0
        %468 = vmatprep.subr.mxu0 0.0
        %469 = vmatpush1.msra.mxu0 0.0
        %470 = vmatprep.subr.mxu0 0.0
        %471 = vmatpush1.msra.mxu0 0.0
        %472 = vmatprep.subr.mxu0 0.0
        %473 = vmatpush1.msra.mxu0 0.0
        %474 = vmatprep.subr.mxu0 0.0
        %475 = vmatpush1.msra.mxu0 0.0
        %476 = vmatprep.subr.mxu0 0.0
        %477 = vmatpush1.msra.mxu0 0.0
        %478 = vmatprep.subr.mxu0 0.0
        %479 = vmatpush1.msra.mxu0 0.0
        %480 = vmatprep.subr.mxu0 0.0
        %481 = vmatpush1.msra.mxu0 0.0
        %482 = vmatprep.subr.mxu0 0.0
        %483 = vmatpush1.msra.mxu0 0.0
        %484 = vmatprep.subr.mxu0 0.0
        %485 = vmatpush1.msra.mxu0 0.0
        %486 = vmatprep.subr.mxu0 0.0
        %487 = vmatpush1.msra.mxu0 0.0
        %488 = vmatprep.subr.mxu0 0.0
        %489 = vmatpush1.msra.mxu0 0.0
        %490 = vmatprep.subr.mxu0 0.0
        %491 = vmatpush1.msra.mxu0 0.0
        %492 = vmatprep.subr.mxu0 0.0
        %493 = vmatpush1.msra.mxu0 0.0
        %494 = vmatprep.subr.mxu0 0.0
        %495 = vmatpush1.msra.mxu0 0.0
        %496 = vmatprep.subr.mxu0 0.0
        %497 = vmatpush1.msra.mxu0 0.0
        %498 = vmatprep.subr.mxu0 0.0
        %499 = vmatpush1.msra.mxu0 0.0
        %500 = vmatprep.subr.mxu0 0.0
        %501 = vmatpush1.msra.mxu0 0.0
        %502 = vmatprep.subr.mxu0 0.0
        %503 = vmatpush1.msra.mxu0 0.0
        %504 = vmatprep.mubr.f32.mxu0 0.0
        %505 = vmatmul.mubr.f32.gmra.mrb[0].mxu0 %v434
        %v506 = vpop.f32.mrb[0].mxu0
        %v507 = vadd.f32 %v431, %v506
        %v508 = vpop.f32.mrb[0].mxu0
        %509 = vdwg.mxu0
        %v510 = vsub.f32 0.0, %v507
        %v511 = vmul.f32 %v510, 1.442695
        %v512 = vpow.pop %v511
        %v513 = vadd.f32 %v512, 1.0
        %v514 = vrcp.pop %v513
        %v515 = vmul.f32 1.0, %v514
        %v516 = vlaneseq
        %v517 = vshrl.u32 %v516, 7
        %v518 = vsub.s32 0, %v517
        %v519 = vrot.slane %v515, %v518
        %521 = vbcast.lane.b32.xlu0 %v519, 256
        %v522 = vpop.permute.xlu0 %521
        %s524 = sor.u32 256, 8
        %525 = vbcast.lane.b32.xlu0 %v519, %s524
        %v526 = vpop.permute.xlu0 %525
        %s528 = sor.u32 256, 16
        %529 = vbcast.lane.b32.xlu0 %v519, %s528
        %v530 = vpop.permute.xlu0 %529
        %s532 = sor.u32 256, 24
        %533 = vbcast.lane.b32.xlu0 %v519, %s532
        %v534 = vpop.permute.xlu0 %533
        %s536 = sor.u32 256, 32
        %537 = vbcast.lane.b32.xlu0 %v519, %s536
        %v538 = vpop.permute.xlu0 %537
        %s540 = sor.u32 256, 40
        %541 = vbcast.lane.b32.xlu0 %v519, %s540
        %v542 = vpop.permute.xlu0 %541
        %s544 = sor.u32 256, 48
        %545 = vbcast.lane.b32.xlu0 %v519, %s544
        %v546 = vpop.permute.xlu0 %545
        %s548 = sor.u32 256, 56
        %549 = vbcast.lane.b32.xlu0 %v519, %s548
        %v550 = vpop.permute.xlu0 %549
        %v551 = vmul.f32 %v243, %v522
        %v552 = vmul.f32 %v244, %v526
        %v553 = vmul.f32 %v245, %v530
        %v554 = vmul.f32 %v246, %v534
        %v555 = vmul.f32 %v247, %v538
        %v556 = vmul.f32 %v248, %v542
        %v557 = vmul.f32 %v249, %v546
        %v558 = vmul.f32 %v250, %v550
        %559 = vst.msk [vmem:[%s242] sm:$0xff] %vm251, %v551
        %560 = vst.msk [vmem:[%s242 + $0x8] sm:$0xff] %vm251, %v552
        %561 = vst.msk [vmem:[%s242 + $0x10] sm:$0xff] %vm251, %v553
        %562 = vst.msk [vmem:[%s242 + $0x18] sm:$0xff] %vm251, %v554
        %563 = vst.msk [vmem:[%s242 + $0x20] sm:$0xff] %vm251, %v555
        %564 = vst.msk [vmem:[%s242 + $0x28] sm:$0xff] %vm251, %v556
        %565 = vst.msk [vmem:[%s242 + $0x30] sm:$0xff] %vm251, %v557
        %566 = vst.msk [vmem:[%s242 + $0x38] sm:$0xff] %vm251, %v558
        %s567 = sand.u32 %s140, 1
        %s568 = scalar_lea.sflag [#allocation4], %s567
        %s569 = sand.u32 %s140, 1
        %s570 = smul.addr %s569, 64
        %s571 = scalar_lea.vmem [#allocation5], %s570
        // Predicated region
        $region45: #{tpu_custom_call.1} parent=39 // pred_check
          %p572 = pneg %p150
        $region46: #{tpu_custom_call.1} parent=39 // pred_check_branch
          %574 = sbr.rel (%p572) target = $region48
        $region47: #{tpu_custom_call.1} parent=39 // pred_region
          %s576 = ssub.s32 1024, 1024
          %577 = vsyncadd %s568, %s576
          %s578 = smul.addr %s22, 8
          %s579 = smul.addr %s578, 128
          %s580 = scalar_lea.hbm %s5, %s579
          %s581 = sshll.u32 %s571, 4
          %s582 = int_to_ptr.vmem [resolvable:$true] %s581
          %587 = dma.vmem_to_hbm [thread:$0]  %s582, 1024, %s580, %s568, 128, 128, 8
        $region48: #{tpu_custom_call.1} parent=39 // pred_fallthru
          _
      $region40: #{tpu_custom_call.1} parent=5 // pred_fallthru
        _
      %p588 = scmp.le.s32.totalorder 2, %s17
      // Predicated region
      $region49: #{tpu_custom_call.1} parent=5 // pred_check
        %p589 = pneg %p588
      $region50: #{tpu_custom_call.1} parent=5 // pred_check_branch
        %591 = sbr.rel (%p589) target = $region52
      $region51: #{tpu_custom_call.1} parent=5 // pred_region
        %s592 = ssub.s32 %s17, 2
        // Predicated region
        $region53: #{tpu_custom_call.1} parent=51 // pred_check
          %p593 = pneg %p156
        $region54: #{tpu_custom_call.1} parent=51 // pred_check_branch
          %595 = sbr.rel (%p593) target = $region56
        $region55: #{tpu_custom_call.1} parent=51 // pred_region
          %s596 = sand.u32 %s141, 1
          %s597 = scalar_lea.sflag [#allocation4], %s596
          %s598 = sand.u32 %s141, 1
          %s599 = smul.addr %s598, 64
          %s600 = scalar_lea.vmem [#allocation5], %s599
          %601 = dma.done %s597, 1024
        $region56: #{tpu_custom_call.1} parent=51 // pred_fallthru
          _
      $region52: #{tpu_custom_call.1} parent=5 // pred_fallthru
        _
    $region6: #{tpu_custom_call.1} parent=1 // loop_footer
      %s21 = sadd.s32 1, %s17
    $region7: #{tpu_custom_call.1} parent=1 // loop_footer_branch
      %16 = sbr.rel target = $region3
    $region8: #{tpu_custom_call.1} parent=1 // loop_exit
      _
    %602 = vsyncpa [#allocation3], 1
    %s603 = scalar_lea.sflag [#allocation3], 1
    %604 = vsyncpa %s603, 1
    %605 = vsyncpa [#allocation4], 1
    %s606 = scalar_lea.sflag [#allocation4], 1
    %607 = vsyncpa %s606, 1

</llo_original>
